<compile_context>
chip_gen: v6e
topology: v6e:2x2x1
jax: 0.10.0
libtpu: 0.0.40
codegen_flags: <defaults>
</compile_context>

<pallas_src>
import functools

import jax
import jax.numpy as jnp
from jax.experimental import pallas as pl
from jax.experimental.pallas import tpu as pltpu


def _avg_pool_matmul_kernel(x_ref, a_ref, o_ref, *, inv_k):
    # x_ref: (B_TILE, LOUT_TILE * k)   lane-dense input rows
    # a_ref: (LOUT_TILE * k, LOUT_TILE) block-diagonal 1.0 window-indicator
    # o_ref: (B_TILE, LOUT_TILE)        lane-dense output rows
    s = jnp.dot(x_ref[...], a_ref[...], preferred_element_type=jnp.float32)
    o_ref[...] = (s * inv_k).astype(o_ref.dtype)


def _pick_tiles(B, L_out, k, itemsize):
    """Choose (b_tile, lout_tile).

    lout_tile: multiple of 128 that exactly divides L_out (keeps every block
    in-bounds along L -> no padded columns in the matmul), else full L_out
    (block == full dim satisfies the (8,128) layout rule).
    b_tile: multiple of 8, sized so double-buffered in+out blocks stay well
    under the v5e 16 MiB scoped-VMEM default.
    """
    lout_tile = L_out
    if L_out % 128 == 0:
        lout_tile = 128
        while (lout_tile * 2 <= 1024
               and L_out % (lout_tile * 2) == 0
               and (2 * lout_tile) * (2 * lout_tile) * k * itemsize <= 2 * 1024 * 1024):
            lout_tile *= 2

    a_bytes = lout_tile * k * lout_tile * itemsize
    per_row = lout_tile * (k + 1) * itemsize
    budget = max(per_row * 8, 6 * 1024 * 1024 - a_bytes)

    if B <= 8:
        b_tile = B
    else:
        b_tile = min(budget // per_row, 1024, ((B + 7) // 8) * 8)
        b_tile = max(8, (b_tile // 8) * 8)
    return int(b_tile), int(lout_tile)


def moving_avg_forward(x, kernel_size: int):
    """Equivalent of moving_avg(kernel_size)(x) for x of shape (N, C, L)."""
    N, C, L = x.shape
    k = int(kernel_size)
    L_out = L // k
    if L_out == 0:
        return jnp.zeros((N, C, 0), x.dtype)
    L_in = L_out * k
    B = N * C

    # AvgPool1d(stride=k, padding=0) drops the tail; the slice is a no-op when
    # k divides L, and the (N, C, L_in) -> (B, L_in) reshape is metadata-only.
    x2 = x[:, :, :L_in].reshape(B, L_in)

    b_tile, lout_tile = _pick_tiles(B, L_out, k, jnp.dtype(x.dtype).itemsize)
    lin_tile = lout_tile * k

    # Block-diagonal window-indicator matrix (exact 1.0 entries; the 1/k scale
    # is applied in f32 inside the kernel so low-precision inputs still
    # accumulate the window sum in float32).
    rows = jnp.arange(lin_tile) // k
    cols = jnp.arange(lout_tile)
    a = (rows[:, None] == cols[None, :]).astype(x.dtype)

    grid = (pl.cdiv(B, b_tile), L_out // lout_tile)

    out = pl.pallas_call(
        functools.partial(_avg_pool_matmul_kernel, inv_k=1.0 / k),
        out_shape=jax.ShapeDtypeStruct((B, L_out), x.dtype),
        grid=grid,
        in_specs=[
            pl.BlockSpec((b_tile, lin_tile), lambda i, j: (i, j)),
            pl.BlockSpec((lin_tile, lout_tile), lambda i, j: (0, 0)),
        ],
        out_specs=pl.BlockSpec((b_tile, lout_tile), lambda i, j: (i, j)),
        compiler_params=pltpu.CompilerParams(
            dimension_semantics=("parallel", "parallel"),
        ),
    )(x2, a)

    return out.reshape(N, C, L_out)


def _ref_moving_avg(x, k):
    N, C, L = x.shape
    L_out = L // k
    return x[:, :, : L_out * k].reshape(N, C, L_out, k).astype(jnp.float32).mean(
        axis=-1
    ).astype(x.dtype)


if __name__ == "__main__":
    key = jax.random.PRNGKey(0)

    # Primary (spec-consistent) small shape.
    N, C, L = 2, 4, 16
    kernel_size = 4
    x = jax.random.normal(key, (N, C, L), dtype=jnp.float32)
    y = jax.block_until_ready(moving_avg_forward(x, kernel_size))
    y_ref = _ref_moving_avg(x, kernel_size)
    assert y.shape == (N, C, L // kernel_size)
    assert jnp.allclose(y, y_ref, atol=1e-5, rtol=1e-5)

    # Extra check exercising the tiled, lane-dense (L_out multiple of 128) path.
    key2 = jax.random.PRNGKey(0)
    x2 = jax.random.normal(key2, (2, 8, 4096), dtype=jnp.float32)
    y2 = jax.block_until_ready(moving_avg_forward(x2, 4))
    assert jnp.allclose(y2, _ref_moving_avg(x2, 4), atol=1e-5, rtol=1e-5)

    # Extra check exercising the tail-drop (L not divisible by k) path.
    x3 = jax.random.normal(key2, (2, 3, 133), dtype=jnp.float32)
    y3 = jax.block_until_ready(moving_avg_forward(x3, 25))
    assert y3.shape == (2, 3, 133 // 25)
    assert jnp.allclose(y3, _ref_moving_avg(x3, 25), atol=1e-5, rtol=1e-5)

    print("KERNEL_OK")
</pallas_src>

<mosaic_0001>
module attributes {stable_mosaic.version = 11 : i64} {
  func.func @_avg_pool_matmul_kernel(%arg0: i32, %arg1: i32, %arg2: memref<8x16xf32, #tpu.memory_space<vmem>>, %arg3: memref<16x4xf32, #tpu.memory_space<vmem>>, %arg4: memref<8x4xf32, #tpu.memory_space<vmem>>) attributes {dimension_semantics = [#tpu.dimension_semantics<parallel>, #tpu.dimension_semantics<parallel>], iteration_bounds = array<i64: 1, 1>, scalar_prefetch = 0 : i64, scratch_operands = 0 : i64, tpu.core_type = #tpu.core_type<tc>, window_params = [{transform_indices = @transform_0, window_bounds = array<i64: 8, 16>}, {pipeline_mode = #tpu.pipeline_mode<synchronous>, transform_indices = @transform_1, window_bounds = array<i64: 16, 4>}, {transform_indices = @transform_2, window_bounds = array<i64: 8, 4>}]} {
    %c0 = arith.constant 0 : index
    %c0_0 = arith.constant 0 : index
    %0 = vector.load %arg2[%c0, %c0_0] : memref<8x16xf32, #tpu.memory_space<vmem>>, vector<8x16xf32>
    %c0_1 = arith.constant 0 : index
    %c0_2 = arith.constant 0 : index
    %1 = vector.load %arg3[%c0_1, %c0_2] : memref<16x4xf32, #tpu.memory_space<vmem>>, vector<16x4xf32>
    %cst = arith.constant dense<0.000000e+00> : vector<8x4xf32>
    %2 = tpu.matmul %0, %1, %cst {dimension_numbers = #tpu.dot_dimension_numbers<[1], [0], [0], [1], [0, 0, 1, 1], [], []>} : vector<8x16xf32>, vector<16x4xf32>, vector<8x4xf32> -> vector<8x4xf32>
    %cst_3 = arith.constant 2.500000e-01 : f32
    %3 = vector.broadcast %cst_3 : f32 to vector<8x4xf32>
    %4 = arith.mulf %2, %3 : vector<8x4xf32>
    %c0_4 = arith.constant 0 : index
    %c0_5 = arith.constant 0 : index
    %5 = vector.load %arg4[%c0_4, %c0_5] : memref<8x4xf32, #tpu.memory_space<vmem>>, vector<8x4xf32>
    tpu.vector_store %arg4[%c0_4, %c0_5], %4 {strides = array<i32>} : memref<8x4xf32, #tpu.memory_space<vmem>>, vector<8x4xf32>,
    return
  }
  func.func @transform_0(%arg0: i32, %arg1: i32) -> (i32, i32) {
    %c0_i32 = arith.constant 0 : i32
    return %arg0, %arg1 : i32, i32
  }
  func.func @transform_1(%arg0: i32, %arg1: i32) -> (i32, i32) {
    %c0_i32 = arith.constant 0 : i32
    %c0_i32_0 = arith.constant 0 : i32
    %c0_i32_1 = arith.constant 0 : i32
    return %c0_i32, %c0_i32_0 : i32, i32
  }
  func.func @transform_2(%arg0: i32, %arg1: i32) -> (i32, i32) {
    %c0_i32 = arith.constant 0 : i32
    return %arg0, %arg1 : i32, i32
  }
}

</mosaic_0001>

<llo_original>
// kernel: tpu_custom_call.1
$region0: #{tpu_custom_call.1}
  #allocation0 [shape = 'u32[]', space=smem, size = 0x4, offset = 0x4, fixed_abs, tag = 'smem constant byte address 0x4 - core index']
  #allocation1 [shape = 'u32[144,128]{1,0:T(1,128)}', space=vmem, size = 0x12000, scoped, tag = 'internal scratch']
  %s0 = inlined_call_operand.vmem [shape: f32[8,16], index: 0, kind: input, shape index: {}]
  %s1 = inlined_call_operand.vmem [shape: f32[16,4], index: 1, kind: input, shape index: {}]
  %s2 = inlined_call_operand.vmem [shape: f32[8,4], index: 2, kind: output, shape index: {}]
  %s3 = sld [smem:[#allocation0]]
  $region18: #{tpu_custom_call.1} parent=0
    _
  %s5 = ssub.s32 1, %s3
  %s6 = scalar_select 0, %s5, %s3
  // Predicated region
  $region2: #{tpu_custom_call.1} parent=0 // pred_check
    _
  $region3: #{tpu_custom_call.1} parent=0 // pred_check_branch
    %8 = sbr.rel (0) target = $region5
  $region4: #{tpu_custom_call.1} parent=0 // pred_region
    _
  $region5: #{tpu_custom_call.1} parent=0 // pred_fallthru
    _
  // Predicated region
  $region6: #{tpu_custom_call.1} parent=0 // pred_check
    _
  $region7: #{tpu_custom_call.1} parent=0 // pred_check_branch
    %10 = sbr.rel (0) target = $region9
  $region8: #{tpu_custom_call.1} parent=0 // pred_region
    _
  $region9: #{tpu_custom_call.1} parent=0 // pred_fallthru
    _
  %v11 = vld [vmem:[%s0] sm:$0xff]
  %v12 = vld [vmem:[%s1] sm:$0xff]
  %v13 = vld [vmem:[%s1 + $0x8] sm:$0xff]
  %vm14 = vcmask 130048
  %v16 = vsel %vm14, %v11, 0
  %18 = vmatprep.subr.mxu0 0.0
  %19 = vmatpush1.msra.mxu0 0.0
  %20 = vmatprep.subr.mxu0 0.0
  %21 = vmatpush1.msra.mxu0 0.0
  %22 = vmatprep.subr.mxu0 0.0
  %23 = vmatpush1.msra.mxu0 0.0
  %24 = vmatprep.subr.mxu0 0.0
  %25 = vmatpush1.msra.mxu0 0.0
  %26 = vmatprep.subr.mxu0 0.0
  %27 = vmatpush1.msra.mxu0 0.0
  %28 = vmatprep.subr.mxu0 0.0
  %29 = vmatpush1.msra.mxu0 0.0
  %30 = vmatprep.subr.mxu0 0.0
  %31 = vmatpush1.msra.mxu0 0.0
  %32 = vmatprep.subr.mxu0 0.0
  %33 = vmatpush1.msra.mxu0 0.0
  %34 = vmatprep.subr.mxu0 0.0
  %35 = vmatpush1.msra.mxu0 0.0
  %36 = vmatprep.subr.mxu0 0.0
  %37 = vmatpush1.msra.mxu0 0.0
  %38 = vmatprep.subr.mxu0 0.0
  %39 = vmatpush1.msra.mxu0 0.0
  %40 = vmatprep.subr.mxu0 0.0
  %41 = vmatpush1.msra.mxu0 0.0
  %42 = vmatprep.subr.mxu0 0.0
  %43 = vmatpush1.msra.mxu0 0.0
  %44 = vmatprep.subr.mxu0 0.0
  %45 = vmatpush1.msra.mxu0 0.0
  %46 = vmatprep.subr.mxu0 0.0
  %47 = vmatpush1.msra.mxu0 %v13
  %48 = vmatprep.subr.mxu0 0.0
  %49 = vmatpush1.msra.mxu0 %v12
  %50 = vmatprep.subr.mxu0 0.0
  %51 = vmatpush2.msra.mxu0 0.0
  %52 = vmatprep.subr.mxu0 0.0
  %53 = vmatpush2.msra.mxu0 0.0
  %54 = vmatprep.subr.mxu0 0.0
  %55 = vmatpush2.msra.mxu0 0.0
  %56 = vmatprep.subr.mxu0 0.0
  %57 = vmatpush2.msra.mxu0 0.0
  %58 = vmatprep.subr.mxu0 0.0
  %59 = vmatpush2.msra.mxu0 0.0
  %60 = vmatprep.subr.mxu0 0.0
  %61 = vmatpush2.msra.mxu0 0.0
  %62 = vmatprep.subr.mxu0 0.0
  %63 = vmatpush2.msra.mxu0 0.0
  %64 = vmatprep.subr.mxu0 0.0
  %65 = vmatpush2.msra.mxu0 0.0
  %66 = vmatprep.subr.mxu0 0.0
  %67 = vmatpush2.msra.mxu0 0.0
  %68 = vmatprep.subr.mxu0 0.0
  %69 = vmatpush2.msra.mxu0 0.0
  %70 = vmatprep.subr.mxu0 0.0
  %71 = vmatpush2.msra.mxu0 0.0
  %72 = vmatprep.subr.mxu0 0.0
  %73 = vmatpush2.msra.mxu0 0.0
  %74 = vmatprep.subr.mxu0 0.0
  %75 = vmatpush2.msra.mxu0 0.0
  %76 = vmatprep.subr.mxu0 0.0
  %77 = vmatpush2.msra.mxu0 0.0
  %78 = vmatprep.subr.mxu0 0.0
  %79 = vmatpush2.msra.mxu0 0.0
  %80 = vmatprep.subr.mxu0 0.0
  %81 = vmatpush2.msra.mxu0 0.0
  %82 = vmatprep.mubr.f32.mxu0 0.0
  %83 = vmatmul.mubr.f32.gmra.mxu0 %v16
  %v84 = vpop.f32.mrf.mxu0
  %v85 = vadd.f32 0.0, %v84
  %v86 = vpop.f32.mrf.mxu0
  %87 = vdwg.mxu0
  %v88 = vmul.f32 %v85, 0.25
  %vm89 = vcmask 31744
  %90 = vst.msk [vmem:[%s2] sm:$0xff] %vm89, %v88
  // Predicated region
  $region10: #{tpu_custom_call.1} parent=0 // pred_check
    _
  $region11: #{tpu_custom_call.1} parent=0 // pred_check_branch
    %92 = sbr.rel (0) target = $region13
  $region12: #{tpu_custom_call.1} parent=0 // pred_region
    _
  $region13: #{tpu_custom_call.1} parent=0 // pred_fallthru
    _
  // Predicated region
  $region14: #{tpu_custom_call.1} parent=0 // pred_check
    _
  $region15: #{tpu_custom_call.1} parent=0 // pred_check_branch
    %94 = sbr.rel (0) target = $region17
  $region16: #{tpu_custom_call.1} parent=0 // pred_region
    _
  $region17: #{tpu_custom_call.1} parent=0 // pred_fallthru
    _

</llo_original>
